<compile_context>
chip_gen: v7x
topology: tpu7x:2x2x1
jax: 0.10.0
libtpu: 0.0.40
codegen_flags: <defaults>
</compile_context>

<pallas_src>
import functools

import jax
import jax.numpy as jnp
from jax import lax
from jax.experimental import pallas as pl
from jax.experimental.pallas import tpu as pltpu

BLOCK_SIZE = 8      # T (sequence length / causal-mask size)
N_EMBED = 32        # C
HEAD_SIZE = 16      # head_size
DROPOUT = 0.2       # eval-mode identity


def _head_kernel(x_ref, a_ref, wv_ref, mask_ref, o_ref, *, scale):
    """Single invocation over the full (tiny) problem.

    x_ref    : (B*T, C)      VMEM bf16 -- flattened token embeddings
    a_ref    : (C, C)        VMEM bf16 -- A = Wq @ Wk^T (folded in the wrapper)
    wv_ref   : (C, H)        VMEM bf16 -- value projection weight
    mask_ref : (B*T, B*T)    VMEM f32  -- additive block-diagonal causal mask
    o_ref    : (B*T, H)      VMEM f32
    """
    x = x_ref[...]                                                    # (BT, C) bf16

    # scores = q @ k^T = (x Wq)(x Wk)^T = x (Wq Wk^T) x^T = (x @ A) @ x^T.
    # Two plain 2-D MXU pushes, no lane-offset slicing, no batched unrolling.
    xa = jnp.dot(x, a_ref[...], preferred_element_type=jnp.float32)  # (BT, C) f32
    s = lax.dot_general(
        xa.astype(jnp.bfloat16), x,
        dimension_numbers=(((1,), (1,)), ((), ())),                  # contract C of both
        preferred_element_type=jnp.float32,
    )                                                                # (BT, BT) f32

    # Scale (reference scales by C ** -0.5, i.e. the embedding dim) and add the
    # precomputed additive mask (0 where attended, -1e30 elsewhere: future positions
    # AND cross-batch positions). Every row keeps its own diagonal -> no NaN risk.
    s = s * scale + mask_ref[...]

    # Numerically stable softmax in f32; reciprocal lowered to the (idle) EUP slot.
    s = s - jnp.max(s, axis=-1, keepdims=True)
    e = jnp.exp(s)
    p = e * pl.reciprocal(jnp.sum(e, axis=-1, keepdims=True), approx=True)

    # Dropout(p=0.2) in eval mode is the identity.
    # TODO(synk): training-mode dropout via pltpu.prng_seed + pltpu.stateful_bernoulli.

    v = jnp.dot(x, wv_ref[...], preferred_element_type=jnp.float32)  # (BT, H) f32
    out = jnp.dot(
        p.astype(jnp.bfloat16), v.astype(jnp.bfloat16),
        preferred_element_type=jnp.float32,
    )                                                                # (BT, H) f32
    o_ref[...] = out.astype(o_ref.dtype)


def make_head_forward(wq, wk, wv, *, batch, seq_len):
    """Build a jitted forward for fixed weights / shapes.

    wq/wk/wv are stored as (C, H) == W_torch.T, so x @ W matches
    nn.Linear(N_EMBED, head_size, bias=False).
    Constants (A, bf16 Wv, block-diagonal mask) are built ONCE here, not per call.
    """
    C, H = wq.shape
    BT = batch * seq_len

    # Folded score weight A = Wq @ Wk^T (f32 product, single bf16 rounding).
    a_bf = (wq @ wk.T).astype(jnp.bfloat16)                          # (C, C)
    wv_bf = wv.astype(jnp.bfloat16)                                  # (C, H)

    # Block-diagonal causal additive mask over the flattened (B*T) axis:
    # position (i, j) is attended iff same batch AND j's time index <= i's.
    idx = jnp.arange(BT)
    same_batch = (idx[:, None] // seq_len) == (idx[None, :] // seq_len)
    causal = (idx[None, :] % seq_len) <= (idx[:, None] % seq_len)
    add_mask = jnp.where(same_batch & causal, 0.0, -1e30).astype(jnp.float32)

    kernel = functools.partial(_head_kernel, scale=C ** (-0.5))

    call = pl.pallas_call(
        kernel,
        out_shape=jax.ShapeDtypeStruct((BT, H), jnp.float32),
        # No grid: the whole problem (~10 KiB) runs in one invocation, avoiding the
        # ~600-cycle-per-step sequential grid overhead.  Everything stays in VMEM.
        in_specs=[
            pl.BlockSpec(memory_space=pltpu.MemorySpace.VMEM),       # x2d   (BT, C)
            pl.BlockSpec(memory_space=pltpu.MemorySpace.VMEM),       # A     (C, C)
            pl.BlockSpec(memory_space=pltpu.MemorySpace.VMEM),       # Wv    (C, H)
            pl.BlockSpec(memory_space=pltpu.MemorySpace.VMEM),       # mask  (BT, BT)
        ],
        out_specs=pl.BlockSpec(memory_space=pltpu.MemorySpace.VMEM),
    )

    @jax.jit
    def forward(x):
        B, T, _ = x.shape
        x2d = x.reshape(B * T, C).astype(jnp.bfloat16)               # dense sublanes
        out2d = call(x2d, a_bf, wv_bf, add_mask)
        return out2d.reshape(B, T, H)

    return forward


def reference_forward(x, wq, wk, wv):
    """Pure-JAX f32 reference matching the PyTorch forward (eval mode)."""
    B, T, C = x.shape
    q = x @ wq
    k = x @ wk
    v = x @ wv
    w = jnp.einsum("btd,bsd->bts", q, k) * C ** (-0.5)
    mask = jnp.tril(jnp.ones((T, T), dtype=bool))
    w = jnp.where(mask, w, -jnp.inf)
    w = jax.nn.softmax(w, axis=-1)
    return w @ v


if __name__ == "__main__":
    key = jax.random.PRNGKey(0)
    kx, kq, kk, kv = jax.random.split(key, 4)

    B, T, C, H = 2, BLOCK_SIZE, N_EMBED, HEAD_SIZE

    x = jax.random.normal(kx, (B, T, C), dtype=jnp.float32)
    # Deterministic "Linear" weights, stored as (C, H) == W_torch.T
    wq = jax.random.normal(kq, (C, H), dtype=jnp.float32) * (C ** -0.5)
    wk = jax.random.normal(kk, (C, H), dtype=jnp.float32) * (C ** -0.5)
    wv = jax.random.normal(kv, (C, H), dtype=jnp.float32) * (C ** -0.5)

    head_forward = make_head_forward(wq, wk, wv, batch=B, seq_len=T)

    out = head_forward(x)
    out = jax.block_until_ready(out)

    ref = reference_forward(x, wq, wk, wv)
    assert out.shape == (B, T, H), out.shape
    # Tolerance 2e-2: bf16 MXU operands (~2^-8 relative rounding on q/k/v/p) combined
    # with the EUP approximate reciprocal (~2^-12) vs. the exact-f32 reference; the
    # outputs are O(1), so this comfortably bounds the combined error while still
    # catching real bugs (wrong mask / scale / transposition would be O(1) off).
    assert jnp.allclose(out, ref, atol=2e-2, rtol=2e-2), float(
        jnp.max(jnp.abs(out - ref))
    )

    print("KERNEL_OK")
</pallas_src>

<mosaic_0001>
module attributes {stable_mosaic.version = 11 : i64} {
  func.func @_head_kernel(%arg0: memref<16x32xbf16, #tpu.memory_space<vmem>>, %arg1: memref<32x32xbf16, #tpu.memory_space<vmem>>, %arg2: memref<32x16xbf16, #tpu.memory_space<vmem>>, %arg3: memref<16x16xf32, #tpu.memory_space<vmem>>, %arg4: memref<16x16xf32, #tpu.memory_space<vmem>>) attributes {dimension_semantics = [], scalar_prefetch = 0 : i64, scratch_operands = 0 : i64, tpu.core_type = #tpu.core_type<tc>} {
    %c0 = arith.constant 0 : index
    %c0_0 = arith.constant 0 : index
    %0 = vector.load %arg0[%c0, %c0_0] : memref<16x32xbf16, #tpu.memory_space<vmem>>, vector<16x32xbf16>
    %c0_1 = arith.constant 0 : index
    %c0_2 = arith.constant 0 : index
    %1 = vector.load %arg1[%c0_1, %c0_2] : memref<32x32xbf16, #tpu.memory_space<vmem>>, vector<32x32xbf16>
    %cst = arith.constant dense<0.000000e+00> : vector<16x32xf32>
    %2 = tpu.matmul %0, %1, %cst {dimension_numbers = #tpu.dot_dimension_numbers<[1], [0], [0], [1], [0, 0, 1, 1], [], []>} : vector<16x32xbf16>, vector<32x32xbf16>, vector<16x32xf32> -> vector<16x32xf32>
    %3 = arith.truncf %2 : vector<16x32xf32> to vector<16x32xbf16>
    %cst_3 = arith.constant dense<0.000000e+00> : vector<16x16xf32>
    %4 = tpu.matmul %3, %0, %cst_3 {dimension_numbers = #tpu.dot_dimension_numbers<[1], [1], [0], [0], [0, 0, 1, 0], [], []>} : vector<16x32xbf16>, vector<16x32xbf16>, vector<16x16xf32> -> vector<16x16xf32>
    %cst_4 = arith.constant 0.176776692 : f32
    %5 = vector.broadcast %cst_4 : f32 to vector<16x16xf32>
    %6 = arith.mulf %4, %5 : vector<16x16xf32>
    %c0_5 = arith.constant 0 : index
    %c0_6 = arith.constant 0 : index
    %7 = vector.load %arg3[%c0_5, %c0_6] : memref<16x16xf32, #tpu.memory_space<vmem>>, vector<16x16xf32>
    %8 = arith.addf %6, %7 : vector<16x16xf32>
    %cst_7 = arith.constant dense<0xFF800000> : vector<16xf32>
    %9 = vector.multi_reduction <maximumf>, %8, %cst_7 [1] : vector<16x16xf32> to vector<16xf32>
    %10 = vector.shape_cast %9 : vector<16xf32> to vector<16x1xf32>
    %11 = vector.broadcast %10 : vector<16x1xf32> to vector<16x16xf32>
    %12 = arith.subf %8, %11 : vector<16x16xf32>
    %13 = math.exp %12 : vector<16x16xf32>
    %cst_8 = arith.constant dense<0.000000e+00> : vector<16xf32>
    %14 = vector.multi_reduction <add>, %13, %cst_8 [1] : vector<16x16xf32> to vector<16xf32>
    %15 = vector.shape_cast %14 : vector<16xf32> to vector<16x1xf32>
    %16 = tpu.reciprocal %15 {approx = true} : vector<16x1xf32> -> vector<16x1xf32>
    %17 = vector.broadcast %16 : vector<16x1xf32> to vector<16x16xf32>
    %18 = arith.mulf %13, %17 : vector<16x16xf32>
    %c0_9 = arith.constant 0 : index
    %c0_10 = arith.constant 0 : index
    %19 = vector.load %arg2[%c0_9, %c0_10] : memref<32x16xbf16, #tpu.memory_space<vmem>>, vector<32x16xbf16>
    %cst_11 = arith.constant dense<0.000000e+00> : vector<16x16xf32>
    %20 = tpu.matmul %0, %19, %cst_11 {dimension_numbers = #tpu.dot_dimension_numbers<[1], [0], [0], [1], [0, 0, 1, 1], [], []>} : vector<16x32xbf16>, vector<32x16xbf16>, vector<16x16xf32> -> vector<16x16xf32>
    %21 = arith.truncf %18 : vector<16x16xf32> to vector<16x16xbf16>
    %22 = arith.truncf %20 : vector<16x16xf32> to vector<16x16xbf16>
    %cst_12 = arith.constant dense<0.000000e+00> : vector<16x16xf32>
    %23 = tpu.matmul %21, %22, %cst_12 {dimension_numbers = #tpu.dot_dimension_numbers<[1], [0], [0], [1], [0, 0, 1, 1], [], []>} : vector<16x16xbf16>, vector<16x16xbf16>, vector<16x16xf32> -> vector<16x16xf32>
    %c0_13 = arith.constant 0 : index
    %c0_14 = arith.constant 0 : index
    %24 = vector.load %arg4[%c0_13, %c0_14] : memref<16x16xf32, #tpu.memory_space<vmem>>, vector<16x16xf32>
    tpu.vector_store %arg4[%c0_13, %c0_14], %23 {strides = array<i32>} : memref<16x16xf32, #tpu.memory_space<vmem>>, vector<16x16xf32>,
    return
  }
}

</mosaic_0001>

<llo_original>
// kernel: forward.1
$region0: #{forward.1}
  #allocation0 [shape = 'u32[]', space=smem, size = 0x4, offset = 0x4, fixed_abs, tag = 'smem constant byte address 0x4 - core index']
  #allocation1 [shape = 'u32[144,128]{1,0:T(1,128)}', space=vmem, size = 0x12000, scoped, tag = 'internal scratch']
  %s0 = inlined_call_operand.vmem [shape: bf16[16,32], index: 0, kind: input, shape index: {}]
  %s1 = inlined_call_operand.vmem [shape: bf16[32,32], index: 1, kind: input, shape index: {}]
  %s2 = inlined_call_operand.vmem [shape: bf16[32,16], index: 2, kind: input, shape index: {}]
  %s3 = inlined_call_operand.hbm [shape: f32[16,16], index: 3, kind: input, shape index: {}]
  %s4 = inlined_call_operand.hbm [shape: f32[16,16], index: 4, kind: output, shape index: {}]
  %s5 = sld [smem:[#allocation0]]
  $region30: #{forward.1} parent=0
    _
  %s7 = ssub.s32 1, %s5
  %s8 = scalar_select 0, %s7, %s5
  $region1: #{forward.1} parent=0
    #allocation2 [shape = 'u8[8192]{0}', space=vmem, size = 0x2000, scoped, tag = 'input window, operand 3, single buffered']
    #allocation3 [shape = 's32[1]{0}', space=sflag, size = 0x4, scoped, tag = 'scoped memory for forward.1']
    #allocation4 [shape = 's32[1]{0}', space=sflag, size = 0x4, scoped, tag = 'scoped memory for forward.1']
    #allocation5 [shape = 'u8[8192]{0}', space=vmem, size = 0x2000, scoped, tag = 'output window, operand 0, single buffered']
    %9 = vsyncpa [#allocation3], 0
    %10 = vsyncpa [#allocation4], 0
    // Predicated region
    $region2: #{forward.1} parent=1 // pred_check
      _
    $region3: #{forward.1} parent=1 // pred_check_branch
      %12 = sbr.rel (0) target = $region5
    $region4: #{forward.1} parent=1 // pred_region
      _
    $region5: #{forward.1} parent=1 // pred_fallthru
      _
    // Predicated region
    $region6: #{forward.1} parent=1 // pred_check
      _
    $region7: #{forward.1} parent=1 // pred_check_branch
      %14 = sbr.rel (0) target = $region9
    $region8: #{forward.1} parent=1 // pred_region
      _
    $region9: #{forward.1} parent=1 // pred_fallthru
      _
    // Predicated region
    $region10: #{forward.1} parent=1 // pred_check
      _
    $region11: #{forward.1} parent=1 // pred_check_branch
      %16 = sbr.rel (0) target = $region13
    $region12: #{forward.1} parent=1 // pred_region
      _
    $region13: #{forward.1} parent=1 // pred_fallthru
      _
    // Predicated region
    $region14: #{forward.1} parent=1 // pred_check
      _
    $region15: #{forward.1} parent=1 // pred_check_branch
      %18 = sbr.rel (0) target = $region17
    $region16: #{forward.1} parent=1 // pred_region
      %s20 = ssub.s32 256, 256
      %21 = vsyncadd [#allocation3], %s20
      %s22 = sshll.u32 [#allocation2], 4
      %s23 = int_to_ptr.vmem [resolvable:$true] %s22
      %28 = dma.hbm_to_vmem [thread:$0]  %s3, 256, %s23, [#allocation3], 128, 128, 8
    $region17: #{forward.1} parent=1 // pred_fallthru
      _
    // Predicated region
    $region18: #{forward.1} parent=1 // pred_check
      _
    $region19: #{forward.1} parent=1 // pred_check_branch
      %30 = sbr.rel (0) target = $region21
    $region20: #{forward.1} parent=1 // pred_region
      %31 = dma.done [#allocation3], 256
    $region21: #{forward.1} parent=1 // pred_fallthru
      _
    %v33 = vld [vmem:[%s0] sm:$0xf]
    %v34 = vld [vmem:[%s0 + $0x4] sm:$0xf]
    %v35 = vld [vmem:[%s1] sm:$0xf]
    %v36 = vld [vmem:[%s1 + $0x4] sm:$0xf]
    %v37 = vld [vmem:[%s1 + $0x8] sm:$0xf]
    %v38 = vld [vmem:[%s1 + $0xc] sm:$0xf]
    %v41 = vunpack.c.l.b16 %v33
    %v42 = vunpack.c.l.b16 %v34
    %v43 = vpack.c.b16 %v42, %v41
    %v48 = vunpack.c.l.b16 %v35
    %v49 = vunpack.c.l.b16 %v36
    %v50 = vunpack.c.l.b16 %v37
    %v51 = vunpack.c.l.b16 %v38
    %v52 = vpack.c.b16 %v49, %v48
    %v53 = vpack.c.b16 %v51, %v50
    %vm56 = vcmask 261120
    %v58 = vsel %vm56, %v43, 0
    %60 = vmatprep.subr.bf16.mxu0 0
    %61 = vmatpush1.bf16.msra.mxu0 %v52
    %62 = vmatprep.subr.bf16.mxu0 0
    %63 = vmatpush1.bf16.msra.mxu0 %v53
    %64 = vmatprep.subr.bf16.mxu0 0
    %65 = vmatpush1.bf16.msra.mxu0 0
    %66 = vmatprep.subr.bf16.mxu0 0
    %67 = vmatpush1.bf16.msra.mxu0 0
    %68 = vmatprep.subr.bf16.mxu0 0
    %69 = vmatpush1.bf16.msra.mxu0 0
    %70 = vmatprep.subr.bf16.mxu0 0
    %71 = vmatpush1.bf16.msra.mxu0 0
    %72 = vmatprep.subr.bf16.mxu0 0
    %73 = vmatpush1.bf16.msra.mxu0 0
    %74 = vmatprep.subr.bf16.mxu0 0
    %75 = vmatpush1.bf16.msra.mxu0 0
    %76 = vmatprep.subr.bf16.mxu0 0
    %77 = vmatpush1.bf16.msra.mxu0 0
    %78 = vmatprep.subr.bf16.mxu0 0
    %79 = vmatpush1.bf16.msra.mxu0 0
    %80 = vmatprep.subr.bf16.mxu0 0
    %81 = vmatpush1.bf16.msra.mxu0 0
    %82 = vmatprep.subr.bf16.mxu0 0
    %83 = vmatpush1.bf16.msra.mxu0 0
    %84 = vmatprep.subr.bf16.mxu0 0
    %85 = vmatpush1.bf16.msra.mxu0 0
    %86 = vmatprep.subr.bf16.mxu0 0
    %87 = vmatpush1.bf16.msra.mxu0 0
    %88 = vmatprep.subr.bf16.mxu0 0
    %89 = vmatpush1.bf16.msra.mxu0 0
    %90 = vmatprep.subr.bf16.mxu0 0
    %91 = vmatpush1.bf16.msra.mxu0 0
    %92 = vmatprep.mubr.bf16.mxu0 0
    %93 = vmatmul.mubr.bf16.gmra.mrb[0].mxu0 %v58
    %v94 = vpop.f32.mrb[0].mxu0
    %v95 = vadd.f32 0.0, %v94
    %v96 = vpop.f32.mrb[0].mxu0
    %v97 = vpop.f32.mrb[0].mxu0
    %v98 = vadd.f32 0.0, %v97
    %v99 = vpop.f32.mrb[0].mxu0
    %100 = vdwg.mxu0
    %v101 = vpack.c.bf16 %v98, %v95
    %v103 = vsel %vm56, %v101, 0
    %105 = vmatprep.subr.bf16.mxu0 0
    %106 = vmatpush1.bf16.xpose.msra.mxu0 %v58
    %107 = vmatprep.subr.bf16.mxu0 0
    %108 = vmatpush1.bf16.xpose.msra.mxu0 0
    %109 = vmatprep.subr.bf16.mxu0 0
    %110 = vmatpush1.bf16.xpose.msra.mxu0 0
    %111 = vmatprep.subr.bf16.mxu0 0
    %112 = vmatpush1.bf16.xpose.msra.mxu0 0
    %113 = vmatprep.subr.bf16.mxu0 0
    %114 = vmatpush1.bf16.xpose.msra.mxu0 0
    %115 = vmatprep.subr.bf16.mxu0 0
    %116 = vmatpush1.bf16.xpose.msra.mxu0 0
    %117 = vmatprep.subr.bf16.mxu0 0
    %118 = vmatpush1.bf16.xpose.msra.mxu0 0
    %119 = vmatprep.subr.bf16.mxu0 0
    %120 = vmatpush1.bf16.xpose.msra.mxu0 0
    %121 = vmatprep.subr.bf16.mxu0 0
    %122 = vmatpush1.bf16.xpose.msra.mxu0 0
    %123 = vmatprep.subr.bf16.mxu0 0
    %124 = vmatpush1.bf16.xpose.msra.mxu0 0
    %125 = vmatprep.subr.bf16.mxu0 0
    %126 = vmatpush1.bf16.xpose.msra.mxu0 0
    %127 = vmatprep.subr.bf16.mxu0 0
    %128 = vmatpush1.bf16.xpose.msra.mxu0 0
    %129 = vmatprep.subr.bf16.mxu0 0
    %130 = vmatpush1.bf16.xpose.msra.mxu0 0
    %131 = vmatprep.subr.bf16.mxu0 0
    %132 = vmatpush1.bf16.xpose.msra.mxu0 0
    %133 = vmatprep.subr.bf16.mxu0 0
    %134 = vmatpush1.bf16.xpose.msra.mxu0 0
    %135 = vmatprep.subr.bf16.mxu0 0
    %136 = vmatpush1.bf16.xpose.msra.mxu0 0
    %137 = vmatprep.mubr.bf16.mxu0 0
    %138 = vmatmul.mubr.bf16.gmra.mrb[0].mxu0 %v103
    %v139 = vpop.f32.mrb[0].mxu0
    %v140 = vadd.f32 0.0, %v139
    %v141 = vpop.f32.mrb[0].mxu0
    %v142 = vpop.f32.mrb[0].mxu0
    %v143 = vadd.f32 0.0, %v142
    %v144 = vpop.f32.mrb[0].mxu0
    %145 = vdwg.mxu0
    %v146 = vmul.f32 %v140, 0.17677669
    %v147 = vmul.f32 %v143, 0.17677669
    %v148 = vld [vmem:[#allocation2] sm:$0xff]
    %v149 = vld [vmem:[#allocation2 + $0x8] sm:$0xff]
    %v150 = vadd.f32 %v146, %v148
    %v151 = vadd.f32 %v147, %v149
    %vm152 = vcmask 130048
    %v153 = vsel %vm152, %v150, -inf
    %154 = vmax.xlane.f32.xlu0 %v153
    %v155 = vpop.xlane.xlu0 %154
    %v156 = vsel %vm152, %v151, -inf
    %157 = vmax.xlane.f32.xlu0 %v156
    %v158 = vpop.xlane.xlu0 %157
    %v159 = vsub.f32 %v150, %v155
    %v160 = vsub.f32 %v151, %v158
    %v161 = vmul.f32 %v159, 1.442695
    %v162 = vpow.pop %v161
    %v163 = vmul.f32 %v160, 1.442695
    %v164 = vpow.pop %v163
    %v165 = vsel %vm152, %v162, 0.0
    %166 = vadd.xlane.f32.xlu0 %v165
    %v167 = vpop.xlane.xlu0 %166
    %v168 = vsel %vm152, %v164, 0.0
    %169 = vadd.xlane.f32.xlu0 %v168
    %v170 = vpop.xlane.xlu0 %169
    %v171 = vrcp.pop %v167
    %v172 = vrcp.pop %v170
    %v173 = vmul.f32 %v162, %v171
    %v174 = vmul.f32 %v164, %v172
    %v175 = vld [vmem:[%s2] sm:$0xf]
    %v176 = vld [vmem:[%s2 + $0x4] sm:$0xf]
    %v177 = vld [vmem:[%s2 + $0x8] sm:$0xf]
    %v178 = vld [vmem:[%s2 + $0xc] sm:$0xf]
    %v183 = vunpack.c.l.b16 %v175
    %v184 = vunpack.c.l.b16 %v176
    %v185 = vunpack.c.l.b16 %v177
    %v186 = vunpack.c.l.b16 %v178
    %v187 = vpack.c.b16 %v184, %v183
    %v188 = vpack.c.b16 %v186, %v185
    %191 = vmatprep.subr.bf16.mxu0 0
    %192 = vmatpush1.bf16.msra.mxu0 %v187
    %193 = vmatprep.subr.bf16.mxu0 0
    %194 = vmatpush1.bf16.msra.mxu0 %v188
    %195 = vmatprep.subr.bf16.mxu0 0
    %196 = vmatpush1.bf16.msra.mxu0 0
    %197 = vmatprep.subr.bf16.mxu0 0
    %198 = vmatpush1.bf16.msra.mxu0 0
    %199 = vmatprep.subr.bf16.mxu0 0
    %200 = vmatpush1.bf16.msra.mxu0 0
    %201 = vmatprep.subr.bf16.mxu0 0
    %202 = vmatpush1.bf16.msra.mxu0 0
    %203 = vmatprep.subr.bf16.mxu0 0
    %204 = vmatpush1.bf16.msra.mxu0 0
    %205 = vmatprep.subr.bf16.mxu0 0
    %206 = vmatpush1.bf16.msra.mxu0 0
    %207 = vmatprep.subr.bf16.mxu0 0
    %208 = vmatpush1.bf16.msra.mxu0 0
    %209 = vmatprep.subr.bf16.mxu0 0
    %210 = vmatpush1.bf16.msra.mxu0 0
    %211 = vmatprep.subr.bf16.mxu0 0
    %212 = vmatpush1.bf16.msra.mxu0 0
    %213 = vmatprep.subr.bf16.mxu0 0
    %214 = vmatpush1.bf16.msra.mxu0 0
    %215 = vmatprep.subr.bf16.mxu0 0
    %216 = vmatpush1.bf16.msra.mxu0 0
    %217 = vmatprep.subr.bf16.mxu0 0
    %218 = vmatpush1.bf16.msra.mxu0 0
    %219 = vmatprep.subr.bf16.mxu0 0
    %220 = vmatpush1.bf16.msra.mxu0 0
    %221 = vmatprep.subr.bf16.mxu0 0
    %222 = vmatpush1.bf16.msra.mxu0 0
    %223 = vmatprep.mubr.bf16.mxu0 0
    %224 = vmatmul.mubr.bf16.gmra.mrb[0].mxu0 %v58
    %v225 = vpop.f32.mrb[0].mxu0
    %v226 = vadd.f32 0.0, %v225
    %v227 = vpop.f32.mrb[0].mxu0
    %v228 = vpop.f32.mrb[0].mxu0
    %v229 = vadd.f32 0.0, %v228
    %v230 = vpop.f32.mrb[0].mxu0
    %231 = vdwg.mxu0
    %v232 = vpack.c.bf16 %v174, %v173
    %v233 = vpack.c.bf16 %v229, %v226
    %v235 = vsel %vm152, %v232, 0
    %237 = vmatprep.subr.bf16.mxu0 0
    %238 = vmatpush1.bf16.msra.mxu0 %v233
    %239 = vmatprep.subr.bf16.mxu0 0
    %240 = vmatpush1.bf16.msra.mxu0 0
    %241 = vmatprep.subr.bf16.mxu0 0
    %242 = vmatpush1.bf16.msra.mxu0 0
    %243 = vmatprep.subr.bf16.mxu0 0
    %244 = vmatpush1.bf16.msra.mxu0 0
    %245 = vmatprep.subr.bf16.mxu0 0
    %246 = vmatpush1.bf16.msra.mxu0 0
    %247 = vmatprep.subr.bf16.mxu0 0
    %248 = vmatpush1.bf16.msra.mxu0 0
    %249 = vmatprep.subr.bf16.mxu0 0
    %250 = vmatpush1.bf16.msra.mxu0 0
    %251 = vmatprep.subr.bf16.mxu0 0
    %252 = vmatpush1.bf16.msra.mxu0 0
    %253 = vmatprep.subr.bf16.mxu0 0
    %254 = vmatpush1.bf16.msra.mxu0 0
    %255 = vmatprep.subr.bf16.mxu0 0
    %256 = vmatpush1.bf16.msra.mxu0 0
    %257 = vmatprep.subr.bf16.mxu0 0
    %258 = vmatpush1.bf16.msra.mxu0 0
    %259 = vmatprep.subr.bf16.mxu0 0
    %260 = vmatpush1.bf16.msra.mxu0 0
    %261 = vmatprep.subr.bf16.mxu0 0
    %262 = vmatpush1.bf16.msra.mxu0 0
    %263 = vmatprep.subr.bf16.mxu0 0
    %264 = vmatpush1.bf16.msra.mxu0 0
    %265 = vmatprep.subr.bf16.mxu0 0
    %266 = vmatpush1.bf16.msra.mxu0 0
    %267 = vmatprep.subr.bf16.mxu0 0
    %268 = vmatpush1.bf16.msra.mxu0 0
    %269 = vmatprep.mubr.bf16.mxu0 0
    %270 = vmatmul.mubr.bf16.gmra.mrb[0].mxu0 %v235
    %v271 = vpop.f32.mrb[0].mxu0
    %v272 = vadd.f32 0.0, %v271
    %v273 = vpop.f32.mrb[0].mxu0
    %v274 = vpop.f32.mrb[0].mxu0
    %v275 = vadd.f32 0.0, %v274
    %v276 = vpop.f32.mrb[0].mxu0
    %277 = vdwg.mxu0
    %278 = vst.msk [vmem:[#allocation5] sm:$0xff] %vm152, %v272
    %279 = vst.msk [vmem:[#allocation5 + $0x8] sm:$0xff] %vm152, %v275
    // Predicated region
    $region22: #{forward.1} parent=1 // pred_check
      _
    $region23: #{forward.1} parent=1 // pred_check_branch
      %281 = sbr.rel (0) target = $region25
    $region24: #{forward.1} parent=1 // pred_region
      %s283 = ssub.s32 256, 256
      %284 = vsyncadd [#allocation4], %s283
      %s285 = sshll.u32 [#allocation5], 4
      %s286 = int_to_ptr.vmem [resolvable:$true] %s285
      %291 = dma.vmem_to_hbm [thread:$0]  %s286, 256, %s4, [#allocation4], 128, 128, 8
    $region25: #{forward.1} parent=1 // pred_fallthru
      _
    // Predicated region
    $region26: #{forward.1} parent=1 // pred_check
      _
    $region27: #{forward.1} parent=1 // pred_check_branch
      %293 = sbr.rel (0) target = $region29
    $region28: #{forward.1} parent=1 // pred_region
      %294 = dma.done [#allocation4], 256
    $region29: #{forward.1} parent=1 // pred_fallthru
      _
    %295 = vsyncpa [#allocation3], 1
    %296 = vsyncpa [#allocation4], 1

</llo_original>
